<compile_context>
chip_gen: v6e
topology: v6e:2x2x1
jax: 0.10.0
libtpu: 0.0.40
codegen_flags: <defaults>
</compile_context>

<pallas_src>
import jax
import jax.numpy as jnp
from jax.experimental import pallas as pl
from jax.experimental.pallas import tpu as pltpu


def _make_conv_mlp_kernel(nb, chid, k_chunk, compute_dtype):
    """Builds the fused kernel body.

    Blocks seen by the kernel:
      x_ref : (nb, Cin,  tm)   pixels on lanes, channels on sublanes
      w1_ref: (Chid, Cin)      fc1 weight (PyTorch layout, 1x1 kernel squeezed)
      b1_ref: (Chid, 1)
      w2_ref: (Cout, Chid)     fc2 weight
      b2_ref: (Cout, 1)
      o_ref : (nb, Cout, tm)
    """
    # Static hidden-dim chunk boundaries: slices below are static (zero-cost
    # views), so only (csz, tm) of the hidden activation is live per step
    # before it is folded into the (Cout, tm) f32 accumulator.
    chunks = [(c0, min(k_chunk, chid - c0)) for c0 in range(0, chid, k_chunk)]

    def kernel(x_ref, w1_ref, b1_ref, w2_ref, b2_ref, o_ref):
        b2 = b2_ref[...]                                    # (Cout, 1)
        for b in range(nb):                                 # static unroll
            x = x_ref[b]                                    # (Cin, tm)
            acc = None
            for c0, csz in chunks:
                w1c = w1_ref[c0:c0 + csz, :]                # (csz, Cin)
                b1c = b1_ref[c0:c0 + csz, :]                # (csz, 1)
                h = jnp.dot(w1c, x, preferred_element_type=jnp.float32) + b1c
                h = jnp.maximum(h, 0.0)                     # act_layer = ReLU
                # norm = Identity, drop = Dropout(0.0) -> no-ops
                part = jnp.dot(w2_ref[:, c0:c0 + csz], h.astype(compute_dtype),
                               preferred_element_type=jnp.float32)
                acc = part if acc is None else acc + part
            o_ref[b] = (acc + b2).astype(o_ref.dtype)

    return kernel


def conv_mlp(x_nchw, w1, b1, w2, b2, *, tm=None, nb=None, k_chunk=256):
    """x_nchw: (N, Cin, H, W).  w1: (Chid, Cin), b1: (Chid,),
    w2: (Cout, Chid), b2: (Cout,).  Returns (N, Cout, H, W).

    Weights are in (squeezed) PyTorch Conv2d layout.  For production channel
    widths, cast x/w1/w2 to bfloat16 before calling (f32 accumulation is kept
    inside the kernel via preferred_element_type)."""
    N, Cin, H, W = x_nchw.shape
    Chid = w1.shape[0]
    Cout = w2.shape[0]
    HW = H * W
    dt = x_nchw.dtype
    isz = jnp.dtype(dt).itemsize

    hw_rounded = pl.cdiv(HW, 128) * 128

    # ---- lane tile: amortize the ~0.35us per-grid-step overhead ------------
    if tm is None:
        target_in_bytes = 256 * 1024
        tm = target_in_bytes // max(1, Cin * isz)
    tm = max(128, min(int(tm), 8192, hw_rounded))
    tm = (tm // 128) * 128
    hw_tiles = pl.cdiv(HW, tm)

    # ---- batch block: when H*W is small, process nb images per step --------
    if nb is None:
        step_in_bytes = Cin * tm * isz
        nb = (256 * 1024) // max(1, step_in_bytes)
    nb = max(1, min(int(nb), N))
    n_tiles = pl.cdiv(N, nb)

    # v7x megacore: keep >= 2 grid steps whenever the problem allows it.
    if n_tiles * hw_tiles < 2:
        if N >= 2:
            nb = pl.cdiv(N, 2)
        elif hw_rounded >= 256:
            tm = max(128, ((hw_rounded // 2) // 128) * 128)
    n_tiles = pl.cdiv(N, nb)
    hw_tiles = pl.cdiv(HW, tm)

    # ---- VMEM budget: shrink tiles if needed, derive the scoped limit ------
    k_eff = min(Chid, k_chunk)

    def vmem_need(tm_, nb_):
        x_buf = 2 * nb_ * Cin * tm_ * isz          # double-buffered input tile
        o_buf = 2 * nb_ * Cout * tm_ * isz         # double-buffered output tile
        h_buf = k_eff * tm_ * 4 + Cout * tm_ * 4   # live hidden chunk + f32 acc
        wts = 2 * (Chid * Cin + Chid + Cout * Chid + Cout) * isz
        return x_buf + o_buf + h_buf + wts

    budget = 24 * 1024 * 1024
    while vmem_need(tm, nb) > budget and nb > 1:
        nb = max(1, nb // 2)
    while vmem_need(tm, nb) > budget and tm > 128:
        tm = max(128, ((tm // 2) // 128) * 128)
    n_tiles = pl.cdiv(N, nb)
    hw_tiles = pl.cdiv(HW, tm)
    # Computed limit with headroom; never request the full physical VMEM (v7x).
    vmem_limit = int(min(48 * 1024 * 1024,
                         max(8 * 1024 * 1024, 2 * vmem_need(tm, nb))))

    # NCHW -> (N, Cin, HW): a pure reshape, no transpose, no padding.
    x = x_nchw.reshape(N, Cin, HW)
    b1_2d = b1.reshape(Chid, 1)
    b2_2d = b2.reshape(Cout, 1)

    kernel = _make_conv_mlp_kernel(nb, Chid, k_eff, dt)

    cost = pl.CostEstimate(
        flops=int(2 * N * HW * (Cin * Chid + Chid * Cout)),
        transcendentals=0,
        bytes_accessed=int(isz * (N * HW * (Cin + Cout)
                                  + Chid * Cin + Chid + Cout * Chid + Cout)),
    )

    out = pl.pallas_call(
        kernel,
        out_shape=jax.ShapeDtypeStruct((N, Cout, HW), dt),
        grid_spec=pltpu.PrefetchScalarGridSpec(
            num_scalar_prefetch=0,
            grid=(n_tiles, hw_tiles),
            in_specs=[
                # activations: lane-dense pixel tile per (batch-block, hw-tile)
                pl.BlockSpec((nb, Cin, tm), lambda i, j: (i, 0, j)),
                # grid-invariant weights / biases (small, kept resident)
                pl.BlockSpec((Chid, Cin), lambda i, j: (0, 0)),
                pl.BlockSpec((Chid, 1), lambda i, j: (0, 0)),
                pl.BlockSpec((Cout, Chid), lambda i, j: (0, 0)),
                pl.BlockSpec((Cout, 1), lambda i, j: (0, 0)),
            ],
            out_specs=pl.BlockSpec((nb, Cout, tm), lambda i, j: (i, 0, j)),
        ),
        compiler_params=pltpu.CompilerParams(
            dimension_semantics=("parallel", "parallel"),
            vmem_limit_bytes=vmem_limit,
        ),
        cost_estimate=cost,
    )(x, w1, b1_2d, w2, b2_2d)

    # (N, Cout, HW) -> NCHW: again a pure reshape, no transpose, no slice.
    return out.reshape(N, Cout, H, W)


if __name__ == "__main__":
    # ConvMlp(in_features=4, hidden_features=32, out_features=4)
    N, Cin, H, W = 2, 4, 16, 16
    Chid, Cout = 32, 4

    key = jax.random.PRNGKey(0)
    kx, k1, kb1, k2, kb2 = jax.random.split(key, 5)

    x = jax.random.normal(kx, (N, Cin, H, W), dtype=jnp.float32)

    # PyTorch layouts: fc1.weight (Chid, Cin, 1, 1) -> (Chid, Cin),
    #                  fc2.weight (Cout, Chid, 1, 1) -> (Cout, Chid).
    w1 = jax.random.normal(k1, (Chid, Cin), dtype=jnp.float32) * 0.1
    b1 = jax.random.normal(kb1, (Chid,), dtype=jnp.float32) * 0.1
    w2 = jax.random.normal(k2, (Cout, Chid), dtype=jnp.float32) * 0.1
    b2 = jax.random.normal(kb2, (Cout,), dtype=jnp.float32) * 0.1

    out = jax.block_until_ready(conv_mlp(x, w1, b1, w2, b2))

    # Pure-JAX reference of the same fused math (1x1 conv == channel matmul).
    x_flat = jnp.transpose(x, (0, 2, 3, 1)).reshape(-1, Cin)
    ref = jnp.maximum(x_flat @ w1.T + b1, 0.0) @ w2.T + b2
    ref = jnp.transpose(ref.reshape(N, H, W, Cout), (0, 3, 1, 2))

    assert out.shape == (N, Cout, H, W)
    assert jnp.allclose(out, ref, atol=1e-5, rtol=1e-5)
    print("KERNEL_OK")
</pallas_src>

<mosaic_0001>
module attributes {stable_mosaic.version = 11 : i64} {
  func.func @kernel(%arg0: i32, %arg1: i32, %arg2: memref<1x4x256xf32, #tpu.memory_space<vmem>>, %arg3: memref<32x4xf32, #tpu.memory_space<vmem>>, %arg4: memref<32x1xf32, #tpu.memory_space<vmem>>, %arg5: memref<4x32xf32, #tpu.memory_space<vmem>>, %arg6: memref<4x1xf32, #tpu.memory_space<vmem>>, %arg7: memref<1x4x256xf32, #tpu.memory_space<vmem>>) attributes {dimension_semantics = [#tpu.dimension_semantics<parallel>, #tpu.dimension_semantics<parallel>], iteration_bounds = array<i64: 2, 1>, scalar_prefetch = 0 : i64, scratch_operands = 0 : i64, tpu.core_type = #tpu.core_type<tc>, window_params = [{transform_indices = @transform_0, window_bounds = array<i64: 1, 4, 256>}, {pipeline_mode = #tpu.pipeline_mode<synchronous>, transform_indices = @transform_1, window_bounds = array<i64: 32, 4>}, {pipeline_mode = #tpu.pipeline_mode<synchronous>, transform_indices = @transform_2, window_bounds = array<i64: 32, 1>}, {pipeline_mode = #tpu.pipeline_mode<synchronous>, transform_indices = @transform_3, window_bounds = array<i64: 4, 32>}, {pipeline_mode = #tpu.pipeline_mode<synchronous>, transform_indices = @transform_4, window_bounds = array<i64: 4, 1>}, {transform_indices = @transform_5, window_bounds = array<i64: 1, 4, 256>}]} {
    %c0 = arith.constant 0 : index
    %c0_0 = arith.constant 0 : index
    %0 = vector.load %arg6[%c0, %c0_0] : memref<4x1xf32, #tpu.memory_space<vmem>>, vector<4x1xf32>
    %c0_1 = arith.constant 0 : index
    %c0_2 = arith.constant 0 : index
    %c0_3 = arith.constant 0 : index
    %1 = vector.load %arg2[%c0_1, %c0_2, %c0_3] : memref<1x4x256xf32, #tpu.memory_space<vmem>>, vector<1x4x256xf32>
    %2 = vector.shape_cast %1 : vector<1x4x256xf32> to vector<4x256xf32>
    %c0_4 = arith.constant 0 : index
    %c0_5 = arith.constant 0 : index
    %3 = vector.load %arg3[%c0_4, %c0_5] : memref<32x4xf32, #tpu.memory_space<vmem>>, vector<32x4xf32>
    %c0_6 = arith.constant 0 : index
    %c0_7 = arith.constant 0 : index
    %4 = vector.load %arg4[%c0_6, %c0_7] : memref<32x1xf32, #tpu.memory_space<vmem>>, vector<32x1xf32>
    %cst = arith.constant dense<0.000000e+00> : vector<32x256xf32>
    %5 = tpu.matmul %3, %2, %cst {dimension_numbers = #tpu.dot_dimension_numbers<[1], [0], [0], [1], [0, 0, 1, 1], [], []>} : vector<32x4xf32>, vector<4x256xf32>, vector<32x256xf32> -> vector<32x256xf32>
    %6 = vector.broadcast %4 : vector<32x1xf32> to vector<32x256xf32>
    %7 = arith.addf %5, %6 : vector<32x256xf32>
    %cst_8 = arith.constant 0.000000e+00 : f32
    %8 = vector.broadcast %cst_8 : f32 to vector<32x256xf32>
    %9 = arith.maximumf %7, %8 : vector<32x256xf32>
    %c0_9 = arith.constant 0 : index
    %c0_10 = arith.constant 0 : index
    %10 = vector.load %arg5[%c0_9, %c0_10] : memref<4x32xf32, #tpu.memory_space<vmem>>, vector<4x32xf32>
    %cst_11 = arith.constant dense<0.000000e+00> : vector<4x256xf32>
    %11 = tpu.matmul %10, %9, %cst_11 {dimension_numbers = #tpu.dot_dimension_numbers<[1], [0], [0], [1], [0, 0, 1, 1], [], []>} : vector<4x32xf32>, vector<32x256xf32>, vector<4x256xf32> -> vector<4x256xf32>
    %12 = vector.broadcast %0 : vector<4x1xf32> to vector<4x256xf32>
    %13 = arith.addf %11, %12 : vector<4x256xf32>
    %c0_12 = arith.constant 0 : index
    %c0_13 = arith.constant 0 : index
    %c0_14 = arith.constant 0 : index
    %14 = vector.load %arg7[%c0_12, %c0_13, %c0_14] : memref<1x4x256xf32, #tpu.memory_space<vmem>>, vector<1x4x256xf32>
    %15 = vector.shape_cast %14 : vector<1x4x256xf32> to vector<4x256xf32>
    %16 = vector.shape_cast %13 : vector<4x256xf32> to vector<1x4x256xf32>
    tpu.vector_store %arg7[%c0_12, %c0_13, %c0_14], %16 {strides = array<i32>} : memref<1x4x256xf32, #tpu.memory_space<vmem>>, vector<1x4x256xf32>,
    return
  }
  func.func @transform_0(%arg0: i32, %arg1: i32) -> (i32, i32, i32) {
    %c0_i32 = arith.constant 0 : i32
    %c0_i32_0 = arith.constant 0 : i32
    return %arg0, %c0_i32, %arg1 : i32, i32, i32
  }
  func.func @transform_1(%arg0: i32, %arg1: i32) -> (i32, i32) {
    %c0_i32 = arith.constant 0 : i32
    %c0_i32_0 = arith.constant 0 : i32
    %c0_i32_1 = arith.constant 0 : i32
    return %c0_i32, %c0_i32_0 : i32, i32
  }
  func.func @transform_2(%arg0: i32, %arg1: i32) -> (i32, i32) {
    %c0_i32 = arith.constant 0 : i32
    %c0_i32_0 = arith.constant 0 : i32
    %c0_i32_1 = arith.constant 0 : i32
    return %c0_i32, %c0_i32_0 : i32, i32
  }
  func.func @transform_3(%arg0: i32, %arg1: i32) -> (i32, i32) {
    %c0_i32 = arith.constant 0 : i32
    %c0_i32_0 = arith.constant 0 : i32
    %c0_i32_1 = arith.constant 0 : i32
    return %c0_i32, %c0_i32_0 : i32, i32
  }
  func.func @transform_4(%arg0: i32, %arg1: i32) -> (i32, i32) {
    %c0_i32 = arith.constant 0 : i32
    %c0_i32_0 = arith.constant 0 : i32
    %c0_i32_1 = arith.constant 0 : i32
    return %c0_i32, %c0_i32_0 : i32, i32
  }
  func.func @transform_5(%arg0: i32, %arg1: i32) -> (i32, i32, i32) {
    %c0_i32 = arith.constant 0 : i32
    %c0_i32_0 = arith.constant 0 : i32
    return %arg0, %c0_i32, %arg1 : i32, i32, i32
  }
}

</mosaic_0001>

<llo_original>
// kernel: tpu_custom_call.1
$region0: #{tpu_custom_call.1}
  #allocation0 [shape = 'u32[]', space=smem, size = 0x4, offset = 0x4, fixed_abs, tag = 'smem constant byte address 0x4 - core index']
  #allocation1 [shape = 'u32[144,128]{1,0:T(1,128)}', space=vmem, size = 0x12000, scoped, tag = 'internal scratch']
  %s0 = inlined_call_operand.vmem [shape: f32[2,4,256], index: 0, kind: input, shape index: {}]
  %s1 = inlined_call_operand.vmem [shape: f32[32,4], index: 1, kind: input, shape index: {}]
  %s2 = inlined_call_operand.vmem [shape: f32[32,1], index: 2, kind: input, shape index: {}]
  %s3 = inlined_call_operand.vmem [shape: f32[4,32], index: 3, kind: input, shape index: {}]
  %s4 = inlined_call_operand.vmem [shape: f32[4,1], index: 4, kind: input, shape index: {}]
  %s5 = inlined_call_operand.hbm [shape: f32[2,4,256], index: 5, kind: output, shape index: {}]
  %s6 = sld [smem:[#allocation0]]
  $region53: #{tpu_custom_call.1} parent=0
    _
  %s8 = ssub.s32 1, %s6
  %s9 = scalar_select 0, %s8, %s6
  $region1: #{tpu_custom_call.1} parent=0
    #allocation2 [shape = 'u8[8192]{0}', space=vmem, size = 0x2000, scoped, tag = 'output window, operand 0']
    #allocation3 [shape = 's32[2]{0}', space=sflag, size = 0x8, scoped, tag = 'scoped memory for tpu_custom_call.1']
    %10 = vsyncpa [#allocation3], 0
    %s11 = scalar_lea.sflag [#allocation3], 1
    %12 = vsyncpa %s11, 0
    loop: start=0, step=1, limit=4
    $region2: #{tpu_custom_call.1} parent=1 // loop_pre_header
      _
    $region3: #{tpu_custom_call.1} parent=1 // loop_header
      %s14 = sphi 0, %s18
      %p15 = scmp.ge.s32.totalorder %s14, 4
      %s21 = sphi 0, %s33
      %s22 = sphi 0, %s29
      %s23 = sphi 0, %s21
      %s24 = sphi 0, %s22
      %s25 = sphi 0, %s23
      %s26 = sphi 0, %s24
      %s38 = sphi 0, %s40
      %s41 = sphi 0, %s38
      %s42 = sphi 0, %s41
      %s58 = sphi 0, %s42
      %s62 = sphi 0, %s62
      %s64 = sphi 0, %s62
      %s65 = sphi 0, %s64
      %s79 = sphi 0, %s65
      %s83 = sphi 0, %s83
      %s85 = sphi 0, %s83
      %s86 = sphi 0, %s85
      %s100 = sphi 0, %s86
      %s104 = sphi 0, %s104
      %s106 = sphi 0, %s104
      %s107 = sphi 0, %s106
      %s121 = sphi 0, %s107
      %s125 = sphi 0, %s125
      %s127 = sphi 0, %s125
      %s128 = sphi 0, %s127
      %s142 = sphi 0, %s128
      %s150 = sphi 0, %s152
      %s153 = sphi 0, %s150
      %s154 = sphi 0, %s153
      %s170 = sphi 0, %s154
    $region4: #{tpu_custom_call.1} parent=1 // loop_header_branch
      %17 = sbr.rel (%p15) target = $region8
    $region5: #{tpu_custom_call.1} parent=1 // loop_body
      %s19 = ssub.s32 %s14, 1
      %s20 = ssub.s32 %s14, 2
      %s27 = sadd.s32 1, %s22
      %p28 = scmp.ge.s32.totalorder %s27, 1
      %s29 = scalar_select %p28, 0, %s27
      %s30 = sadd.s32 1, %s21
      %s31 = scalar_select %p28, %s30, %s21
      %p32 = scmp.ge.s32.totalorder %s31, 2
      %s33 = scalar_select %p32, 0, %s31
      %s34 = ssub.s32 %s21, %s33
      %s35 = ssub.s32 %s22, %s29
      %s36 = sor.u32 %s34, %s35
      %p37 = scmp.eq.s32.totalorder %s36, 0
      %s39 = sadd.s32 %s38, 1
      %s40 = scalar_select %p37, %s38, %s39
      %p43 = pneg %p37
      %p44 = scmp.eq.s32.totalorder %s14, 1
      %p45 = por %p43, %p44
      %p46 = scmp.ne.s32.totalorder %s38, %s41
      %p47 = scmp.eq.s32.totalorder %s14, 0
      %p48 = por %p46, %p47
      %p49 = scmp.ne.s32.totalorder %s38, %s41
      %p50 = scmp.eq.s32.totalorder %s19, 1
      %p51 = por %p49, %p50
      %p52 = scmp.ne.s32.totalorder %s41, %s42
      %p53 = scmp.eq.s32.totalorder %s19, 0
      %p54 = por %p52, %p53
      %p55 = scmp.ne.s32.totalorder %s41, %s42
      %p56 = scmp.eq.s32.totalorder %s20, 1
      %p57 = por %p55, %p56
      %p59 = scmp.ne.s32.totalorder %s42, %s58
      %p60 = scmp.eq.s32.totalorder %s20, 0
      %p61 = por %p59, %p60
      %s63 = sadd.s32 %s62, 1
      %p66 = scmp.eq.s32.totalorder %s14, 1
      %p67 = scmp.ne.s32.totalorder %s62, %s64
      %p68 = scmp.eq.s32.totalorder %s14, 0
      %p69 = por %p67, %p68
      %p70 = scmp.ne.s32.totalorder %s62, %s64
      %p71 = scmp.eq.s32.totalorder %s19, 1
      %p72 = por %p70, %p71
      %p73 = scmp.ne.s32.totalorder %s64, %s65
      %p74 = scmp.eq.s32.totalorder %s19, 0
      %p75 = por %p73, %p74
      %p76 = scmp.ne.s32.totalorder %s64, %s65
      %p77 = scmp.eq.s32.totalorder %s20, 1
      %p78 = por %p76, %p77
      %p80 = scmp.ne.s32.totalorder %s65, %s79
      %p81 = scmp.eq.s32.totalorder %s20, 0
      %p82 = por %p80, %p81
      %s84 = sadd.s32 %s83, 1
      %p87 = scmp.eq.s32.totalorder %s14, 1
      %p88 = scmp.ne.s32.totalorder %s83, %s85
      %p89 = scmp.eq.s32.totalorder %s14, 0
      %p90 = por %p88, %p89
      %p91 = scmp.ne.s32.totalorder %s83, %s85
      %p92 = scmp.eq.s32.totalorder %s19, 1
      %p93 = por %p91, %p92
      %p94 = scmp.ne.s32.totalorder %s85, %s86
      %p95 = scmp.eq.s32.totalorder %s19, 0
      %p96 = por %p94, %p95
      %p97 = scmp.ne.s32.totalorder %s85, %s86
      %p98 = scmp.eq.s32.totalorder %s20, 1
      %p99 = por %p97, %p98
      %p101 = scmp.ne.s32.totalorder %s86, %s100
      %p102 = scmp.eq.s32.totalorder %s20, 0
      %p103 = por %p101, %p102
      %s105 = sadd.s32 %s104, 1
      %p108 = scmp.eq.s32.totalorder %s14, 1
      %p109 = scmp.ne.s32.totalorder %s104, %s106
      %p110 = scmp.eq.s32.totalorder %s14, 0
      %p111 = por %p109, %p110
      %p112 = scmp.ne.s32.totalorder %s104, %s106
      %p113 = scmp.eq.s32.totalorder %s19, 1
      %p114 = por %p112, %p113
      %p115 = scmp.ne.s32.totalorder %s106, %s107
      %p116 = scmp.eq.s32.totalorder %s19, 0
      %p117 = por %p115, %p116
      %p118 = scmp.ne.s32.totalorder %s106, %s107
      %p119 = scmp.eq.s32.totalorder %s20, 1
      %p120 = por %p118, %p119
      %p122 = scmp.ne.s32.totalorder %s107, %s121
      %p123 = scmp.eq.s32.totalorder %s20, 0
      %p124 = por %p122, %p123
      %s126 = sadd.s32 %s125, 1
      %p129 = scmp.eq.s32.totalorder %s14, 1
      %p130 = scmp.ne.s32.totalorder %s125, %s127
      %p131 = scmp.eq.s32.totalorder %s14, 0
      %p132 = por %p130, %p131
      %p133 = scmp.ne.s32.totalorder %s125, %s127
      %p134 = scmp.eq.s32.totalorder %s19, 1
      %p135 = por %p133, %p134
      %p136 = scmp.ne.s32.totalorder %s127, %s128
      %p137 = scmp.eq.s32.totalorder %s19, 0
      %p138 = por %p136, %p137
      %p139 = scmp.ne.s32.totalorder %s127, %s128
      %p140 = scmp.eq.s32.totalorder %s20, 1
      %p141 = por %p139, %p140
      %p143 = scmp.ne.s32.totalorder %s128, %s142
      %p144 = scmp.eq.s32.totalorder %s20, 0
      %p145 = por %p143, %p144
      %s146 = ssub.s32 %s21, %s33
      %s147 = ssub.s32 %s22, %s29
      %s148 = sor.u32 %s146, %s147
      %p149 = scmp.eq.s32.totalorder %s148, 0
      %s151 = sadd.s32 %s150, 1
      %s152 = scalar_select %p149, %s150, %s151
      %p155 = pneg %p149
      %p156 = scmp.eq.s32.totalorder %s14, 1
      %p157 = por %p155, %p156
      %p158 = scmp.ne.s32.totalorder %s150, %s153
      %p159 = scmp.eq.s32.totalorder %s14, 0
      %p160 = por %p158, %p159
      %p161 = scmp.ne.s32.totalorder %s150, %s153
      %p162 = scmp.eq.s32.totalorder %s19, 1
      %p163 = por %p161, %p162
      %p164 = scmp.ne.s32.totalorder %s153, %s154
      %p165 = scmp.eq.s32.totalorder %s19, 0
      %p166 = por %p164, %p165
      %p167 = scmp.ne.s32.totalorder %s153, %s154
      %p168 = scmp.eq.s32.totalorder %s20, 1
      %p169 = por %p167, %p168
      %p171 = scmp.ne.s32.totalorder %s154, %s170
      %p172 = scmp.eq.s32.totalorder %s20, 0
      %p173 = por %p171, %p172
      %p174 = scmp.le.s32.totalorder 1, %s14
      %p175 = scmp.lt.s32.totalorder %s14, 3
      %p176 = pnand %p174, %p175
      %p177 = pneg %p176
      // Predicated region
      $region9: #{tpu_custom_call.1} parent=5 // pred_check
        _
      $region10: #{tpu_custom_call.1} parent=5 // pred_check_branch
        %179 = sbr.rel (%p176) target = $region12
      $region11: #{tpu_custom_call.1} parent=5 // pred_region
        %s180 = ssub.s32 %s14, 1
        // Predicated region
        $region13: #{tpu_custom_call.1} parent=11 // pred_check
          %p181 = pneg %p75
        $region14: #{tpu_custom_call.1} parent=11 // pred_check_branch
          %183 = sbr.rel (%p181) target = $region16
        $region15: #{tpu_custom_call.1} parent=11 // pred_region
          _
        $region16: #{tpu_custom_call.1} parent=11 // pred_fallthru
          _
        // Predicated region
        $region17: #{tpu_custom_call.1} parent=11 // pred_check
          %p184 = pneg %p96
        $region18: #{tpu_custom_call.1} parent=11 // pred_check_branch
          %186 = sbr.rel (%p184) target = $region20
        $region19: #{tpu_custom_call.1} parent=11 // pred_region
          _
        $region20: #{tpu_custom_call.1} parent=11 // pred_fallthru
          _
        // Predicated region
        $region21: #{tpu_custom_call.1} parent=11 // pred_check
          %p187 = pneg %p117
        $region22: #{tpu_custom_call.1} parent=11 // pred_check_branch
          %189 = sbr.rel (%p187) target = $region24
        $region23: #{tpu_custom_call.1} parent=11 // pred_region
          _
        $region24: #{tpu_custom_call.1} parent=11 // pred_fallthru
          _
        // Predicated region
        $region25: #{tpu_custom_call.1} parent=11 // pred_check
          %p190 = pneg %p138
        $region26: #{tpu_custom_call.1} parent=11 // pred_check_branch
          %192 = sbr.rel (%p190) target = $region28
        $region27: #{tpu_custom_call.1} parent=11 // pred_region
          _
        $region28: #{tpu_custom_call.1} parent=11 // pred_fallthru
          _
      $region12: #{tpu_custom_call.1} parent=5 // pred_fallthru
        _
      %p193 = scmp.lt.s32.totalorder %s14, 2
      // Predicated region
      $region29: #{tpu_custom_call.1} parent=5 // pred_check
        %p194 = pneg %p193
      $region30: #{tpu_custom_call.1} parent=5 // pred_check_branch
        %196 = sbr.rel (%p194) target = $region32
      $region31: #{tpu_custom_call.1} parent=5 // pred_region
        // Predicated region
        $region33: #{tpu_custom_call.1} parent=31 // pred_check
          %p197 = pneg %p48
        $region34: #{tpu_custom_call.1} parent=31 // pred_check_branch
          %199 = sbr.rel (%p197) target = $region36
        $region35: #{tpu_custom_call.1} parent=31 // pred_region
          %s200 = smul.u32 2, %s22
          %p201 = scmp.lt.s32.totalorder %s21, 1
          %s202 = scalar_select %p201, %s21, 1
          %p203 = scmp.lt.s32.totalorder %s200, 1
          %s204 = scalar_select %p203, %s200, 1
          %s205 = smul.addr %s202, 2
          %s206 = sadd.s32 %s204, %s205
          %s207 = smul.addr %s206, 4
          %s208 = scalar_lea.vmem %s0, %s207
          %s209 = smul.u32 2, %s22
        $region36: #{tpu_custom_call.1} parent=31 // pred_fallthru
          _
      $region32: #{tpu_custom_call.1} parent=5 // pred_fallthru
        _
      %p210 = scmp.le.s32.totalorder 1, %s14
      %p211 = scmp.lt.s32.totalorder %s14, 3
      %p212 = pnand %p210, %p211
      %p213 = pneg %p212
      // Predicated region
      $region37: #{tpu_custom_call.1} parent=5 // pred_check
        _
      $region38: #{tpu_custom_call.1} parent=5 // pred_check_branch
        %215 = sbr.rel (%p212) target = $region40
      $region39: #{tpu_custom_call.1} parent=5 // pred_region
        %s216 = ssub.s32 %s14, 1
        %s217 = smul.u32 2, %s24
        %p218 = scmp.lt.s32.totalorder %s23, 1
        %s219 = scalar_select %p218, %s23, 1
        %p220 = scmp.lt.s32.totalorder %s217, 1
        %s221 = scalar_select %p220, %s217, 1
        %s222 = smul.addr %s219, 2
        %s223 = sadd.s32 %s221, %s222
        %s224 = smul.addr %s223, 4
        %s225 = scalar_lea.vmem %s0, %s224
        %p226 = pneg %p54
        %p227 = pneg %p51
        %p228 = pneg %p75
        %p229 = pneg %p72
        %p230 = pneg %p96
        %p231 = pneg %p93
        %p232 = pneg %p117
        %p233 = pneg %p114
        %p234 = pneg %p138
        %p235 = pneg %p135
        %p236 = pneg %p166
        %p237 = pneg %p163
        %s238 = sand.u32 %s153, 1
        %s239 = scalar_lea.sflag [#allocation3], %s238
        %s240 = sand.u32 %s153, 1
        %s241 = smul.addr %s240, 8
        %s242 = scalar_lea.vmem [#allocation2], %s241
        %s243 = smul.u32 2, %s24
        %p244 = scmp.lt.s32.totalorder %s23, 1
        %s245 = scalar_select %p244, %s23, 1
        %p246 = scmp.lt.s32.totalorder %s243, 1
        %s247 = scalar_select %p246, %s243, 1
        %s248 = smul.addr %s245, 2
        %s249 = sadd.s32 %s247, %s248
        %s250 = smul.addr %s249, 4
        %s251 = scalar_lea.vmem %s0, %s250
        %s252 = smul.u32 2, %s24
        %s253 = smul.u32 2, %s24
        %v254 = vld [vmem:[%s4] sm:$0xf]
        %v255 = vld [vmem:[%s251] sm:$0xff]
        %v256 = vld [vmem:[%s1] sm:$0xff]
        %v257 = vld [vmem:[%s1 + $0x8] sm:$0xff]
        %v258 = vld [vmem:[%s1 + $0x10] sm:$0xff]
        %v259 = vld [vmem:[%s1 + $0x18] sm:$0xff]
        %v260 = vld [vmem:[%s2] sm:$0xff]
        %v261 = vld [vmem:[%s2 + $0x8] sm:$0xff]
        %v262 = vld [vmem:[%s2 + $0x10] sm:$0xff]
        %v263 = vld [vmem:[%s2 + $0x18] sm:$0xff]
        %265 = vset.pattern.permute.xlu0 0
        %266 = vperm.xlu0 %265, %v260
        %v267 = vpop.permute.xlu0 %266
        %270 = vset.pattern.permute.xlu0 0
        %271 = vperm.xlu0 %270, %v261
        %v272 = vpop.permute.xlu0 %271
        %275 = vset.pattern.permute.xlu0 0
        %276 = vperm.xlu0 %275, %v262
        %v277 = vpop.permute.xlu0 %276
        %280 = vset.pattern.permute.xlu0 0
        %281 = vperm.xlu0 %280, %v263
        %v282 = vpop.permute.xlu0 %281
        %v285 = vcombine.high %v255, %v255
        %vm286 = vcmask 31744
        %v288 = vsel %vm286, %v256, 0
        %v291 = vsel %vm286, %v257, 0
        %v294 = vsel %vm286, %v258, 0
        %v297 = vsel %vm286, %v259, 0
        %vm299 = vcmask 1043456
        %v300 = vsel %vm299, %v255, 0
        %v302 = vsel %vm299, %v285, 0
        %304 = vmatprep.subr.mxu0 0.0
        %305 = vmatpush1.msra.mxu0 0.0
        %306 = vmatprep.subr.mxu0 0.0
        %307 = vmatpush1.msra.mxu0 0.0
        %308 = vmatprep.subr.mxu0 0.0
        %309 = vmatpush1.msra.mxu0 0.0
        %310 = vmatprep.subr.mxu0 0.0
        %311 = vmatpush1.msra.mxu0 0.0
        %312 = vmatprep.subr.mxu0 0.0
        %313 = vmatpush1.msra.mxu0 0.0
        %314 = vmatprep.subr.mxu0 0.0
        %315 = vmatpush1.msra.mxu0 0.0
        %316 = vmatprep.subr.mxu0 0.0
        %317 = vmatpush1.msra.mxu0 0.0
        %318 = vmatprep.subr.mxu0 0.0
        %319 = vmatpush1.msra.mxu0 0.0
        %320 = vmatprep.subr.mxu0 0.0
        %321 = vmatpush1.msra.mxu0 0.0
        %322 = vmatprep.subr.mxu0 0.0
        %323 = vmatpush1.msra.mxu0 0.0
        %324 = vmatprep.subr.mxu0 0.0
        %325 = vmatpush1.msra.mxu0 0.0
        %326 = vmatprep.subr.mxu0 0.0
        %327 = vmatpush1.msra.mxu0 0.0
        %328 = vmatprep.subr.mxu0 0.0
        %329 = vmatpush1.msra.mxu0 0.0
        %330 = vmatprep.subr.mxu0 0.0
        %331 = vmatpush1.msra.mxu0 0.0
        %332 = vmatprep.subr.mxu0 0.0
        %333 = vmatpush1.msra.mxu0 0.0
        %334 = vmatprep.subr.mxu0 %v302
        %335 = vmatpush1.msra.mxu0 %v300
        %336 = vmatprep.subr.mxu0 0.0
        %337 = vmatpush2.msra.mxu0 0.0
        %338 = vmatprep.subr.mxu0 0.0
        %339 = vmatpush2.msra.mxu0 0.0
        %340 = vmatprep.subr.mxu0 0.0
        %341 = vmatpush2.msra.mxu0 0.0
        %342 = vmatprep.subr.mxu0 0.0
        %343 = vmatpush2.msra.mxu0 0.0
        %344 = vmatprep.subr.mxu0 0.0
        %345 = vmatpush2.msra.mxu0 0.0
        %346 = vmatprep.subr.mxu0 0.0
        %347 = vmatpush2.msra.mxu0 0.0
        %348 = vmatprep.subr.mxu0 0.0
        %349 = vmatpush2.msra.mxu0 0.0
        %350 = vmatprep.subr.mxu0 0.0
        %351 = vmatpush2.msra.mxu0 0.0
        %352 = vmatprep.subr.mxu0 0.0
        %353 = vmatpush2.msra.mxu0 0.0
        %354 = vmatprep.subr.mxu0 0.0
        %355 = vmatpush2.msra.mxu0 0.0
        %356 = vmatprep.subr.mxu0 0.0
        %357 = vmatpush2.msra.mxu0 0.0
        %358 = vmatprep.subr.mxu0 0.0
        %359 = vmatpush2.msra.mxu0 0.0
        %360 = vmatprep.subr.mxu0 0.0
        %361 = vmatpush2.msra.mxu0 0.0
        %362 = vmatprep.subr.mxu0 0.0
        %363 = vmatpush2.msra.mxu0 0.0
        %364 = vmatprep.subr.mxu0 0.0
        %365 = vmatpush2.msra.mxu0 0.0
        %366 = vmatprep.subr.mxu0 0.0
        %367 = vmatpush2.msra.mxu0 0.0
        %368 = vmatprep.mubr.f32.mxu0 0.0
        %369 = vmatmul.mubr.f32.gmra.mxu0 %v288
        %v370 = vpop.f32.mrf.mxu0
        %v371 = vadd.f32 %v267, %v370
        %v372 = vpop.f32.mrf.mxu0
        %v373 = vadd.f32 %v267, %v372
        %374 = vmatprep.mubr.f32.mxu0 0.0
        %375 = vmatmul.mubr.f32.gmra.mxu0 %v291
        %v376 = vpop.f32.mrf.mxu0
        %v377 = vadd.f32 %v272, %v376
        %v378 = vpop.f32.mrf.mxu0
        %v379 = vadd.f32 %v272, %v378
        %380 = vmatprep.mubr.f32.mxu0 0.0
        %381 = vmatmul.mubr.f32.gmra.mxu0 %v294
        %v382 = vpop.f32.mrf.mxu0
        %v383 = vadd.f32 %v277, %v382
        %v384 = vpop.f32.mrf.mxu0
        %v385 = vadd.f32 %v277, %v384
        %386 = vmatprep.mubr.f32.mxu0 0.0
        %387 = vmatmul.mubr.f32.gmra.mxu0 %v297
        %v388 = vpop.f32.mrf.mxu0
        %v389 = vadd.f32 %v282, %v388
        %v390 = vpop.f32.mrf.mxu0
        %v391 = vadd.f32 %v282, %v390
        %392 = vdwg.mxu0
        %v393 = vmax.f32 %v371, 0.0
        %v394 = vmax.f32 %v373, 0.0
        %v395 = vmax.f32 %v377, 0.0
        %v396 = vmax.f32 %v379, 0.0
        %v397 = vmax.f32 %v383, 0.0
        %v398 = vmax.f32 %v385, 0.0
        %v399 = vmax.f32 %v389, 0.0
        %v400 = vmax.f32 %v391, 0.0
        %v401 = vld [vmem:[%s3] sm:$0xf]
        %403 = vset.pattern.permute.xlu0 0
        %404 = vperm.xlu0 %403, %v254
        %v405 = vpop.permute.xlu0 %404
        %vm407 = vcmask 261120
        %v409 = vsel %vm407, %v401, 0
        %411 = vmatprep.subr.mxu0 0.0
        %412 = vmatpush1.msra.mxu0 0.0
        %413 = vmatprep.subr.mxu0 0.0
        %414 = vmatpush1.msra.mxu0 0.0
        %415 = vmatprep.subr.mxu0 0.0
        %416 = vmatpush1.msra.mxu0 0.0
        %417 = vmatprep.subr.mxu0 0.0
        %418 = vmatpush1.msra.mxu0 0.0
        %419 = vmatprep.subr.mxu0 0.0
        %420 = vmatpush1.msra.mxu0 0.0
        %421 = vmatprep.subr.mxu0 0.0
        %422 = vmatpush1.msra.mxu0 0.0
        %423 = vmatprep.subr.mxu0 0.0
        %424 = vmatpush1.msra.mxu0 0.0
        %425 = vmatprep.subr.mxu0 0.0
        %426 = vmatpush1.msra.mxu0 0.0
        %427 = vmatprep.subr.mxu0 0.0
        %428 = vmatpush1.msra.mxu0 0.0
        %429 = vmatprep.subr.mxu0 0.0
        %430 = vmatpush1.msra.mxu0 0.0
        %431 = vmatprep.subr.mxu0 0.0
        %432 = vmatpush1.msra.mxu0 0.0
        %433 = vmatprep.subr.mxu0 0.0
        %434 = vmatpush1.msra.mxu0 0.0
        %435 = vmatprep.subr.mxu0 %v400
        %436 = vmatpush1.msra.mxu0 %v399
        %437 = vmatprep.subr.mxu0 %v398
        %438 = vmatpush1.msra.mxu0 %v397
        %439 = vmatprep.subr.mxu0 %v396
        %440 = vmatpush1.msra.mxu0 %v395
        %441 = vmatprep.subr.mxu0 %v394
        %442 = vmatpush1.msra.mxu0 %v393
        %443 = vmatprep.subr.mxu0 0.0
        %444 = vmatpush2.msra.mxu0 0.0
        %445 = vmatprep.subr.mxu0 0.0
        %446 = vmatpush2.msra.mxu0 0.0
        %447 = vmatprep.subr.mxu0 0.0
        %448 = vmatpush2.msra.mxu0 0.0
        %449 = vmatprep.subr.mxu0 0.0
        %450 = vmatpush2.msra.mxu0 0.0
        %451 = vmatprep.subr.mxu0 0.0
        %452 = vmatpush2.msra.mxu0 0.0
        %453 = vmatprep.subr.mxu0 0.0
        %454 = vmatpush2.msra.mxu0 0.0
        %455 = vmatprep.subr.mxu0 0.0
        %456 = vmatpush2.msra.mxu0 0.0
        %457 = vmatprep.subr.mxu0 0.0
        %458 = vmatpush2.msra.mxu0 0.0
        %459 = vmatprep.subr.mxu0 0.0
        %460 = vmatpush2.msra.mxu0 0.0
        %461 = vmatprep.subr.mxu0 0.0
        %462 = vmatpush2.msra.mxu0 0.0
        %463 = vmatprep.subr.mxu0 0.0
        %464 = vmatpush2.msra.mxu0 0.0
        %465 = vmatprep.subr.mxu0 0.0
        %466 = vmatpush2.msra.mxu0 0.0
        %467 = vmatprep.subr.mxu0 0.0
        %468 = vmatpush2.msra.mxu0 0.0
        %469 = vmatprep.subr.mxu0 0.0
        %470 = vmatpush2.msra.mxu0 0.0
        %471 = vmatprep.subr.mxu0 0.0
        %472 = vmatpush2.msra.mxu0 0.0
        %473 = vmatprep.subr.mxu0 0.0
        %474 = vmatpush2.msra.mxu0 0.0
        %475 = vmatprep.mubr.f32.mxu0 0.0
        %476 = vmatmul.mubr.f32.gmra.mxu0 %v409
        %v477 = vpop.f32.mrf.mxu0
        %v478 = vadd.f32 %v405, %v477
        %v479 = vpop.f32.mrf.mxu0
        %v480 = vadd.f32 %v405, %v479
        %481 = vdwg.mxu0
        %v484 = vcombine.low %v478, %v480
        %486 = vst [vmem:[%s242] sm:$0xff] %v484
        %s487 = sand.u32 %s153, 1
        %s488 = scalar_lea.sflag [#allocation3], %s487
        %s489 = sand.u32 %s153, 1
        %s490 = smul.addr %s489, 8
        %s491 = scalar_lea.vmem [#allocation2], %s490
        // Predicated region
        $region41: #{tpu_custom_call.1} parent=39 // pred_check
          %p492 = pneg %p163
        $region42: #{tpu_custom_call.1} parent=39 // pred_check_branch
          %494 = sbr.rel (%p492) target = $region44
        $region43: #{tpu_custom_call.1} parent=39 // pred_region
          %s495 = smul.u32 2, %s24
          %s497 = ssub.s32 128, 128
          %498 = vsyncadd %s488, %s497
          %s499 = smul.addr %s23, 2
          %s500 = sadd.s32 %s495, %s499
          %s501 = smul.addr %s500, 64
          %s502 = scalar_lea.hbm %s5, %s501
          %s504 = sshll.u32 %s491, 4
          %s505 = int_to_ptr.vmem [resolvable:$true] %s504
          %507 = dma.vmem_to_hbm [thread:$0]  %s505, 128, %s502, %s488
        $region44: #{tpu_custom_call.1} parent=39 // pred_fallthru
          _
      $region40: #{tpu_custom_call.1} parent=5 // pred_fallthru
        _
      %p508 = scmp.le.s32.totalorder 2, %s14
      // Predicated region
      $region45: #{tpu_custom_call.1} parent=5 // pred_check
        %p509 = pneg %p508
      $region46: #{tpu_custom_call.1} parent=5 // pred_check_branch
        %511 = sbr.rel (%p509) target = $region48
      $region47: #{tpu_custom_call.1} parent=5 // pred_region
        %s512 = ssub.s32 %s14, 2
        // Predicated region
        $region49: #{tpu_custom_call.1} parent=47 // pred_check
          %p513 = pneg %p169
        $region50: #{tpu_custom_call.1} parent=47 // pred_check_branch
          %515 = sbr.rel (%p513) target = $region52
        $region51: #{tpu_custom_call.1} parent=47 // pred_region
          %s516 = sand.u32 %s154, 1
          %s517 = scalar_lea.sflag [#allocation3], %s516
          %s518 = sand.u32 %s154, 1
          %s519 = smul.addr %s518, 8
          %s520 = scalar_lea.vmem [#allocation2], %s519
          %521 = dma.done %s517, 128
        $region52: #{tpu_custom_call.1} parent=47 // pred_fallthru
          _
      $region48: #{tpu_custom_call.1} parent=5 // pred_fallthru
        _
    $region6: #{tpu_custom_call.1} parent=1 // loop_footer
      %s18 = sadd.s32 1, %s14
    $region7: #{tpu_custom_call.1} parent=1 // loop_footer_branch
      %13 = sbr.rel target = $region3
    $region8: #{tpu_custom_call.1} parent=1 // loop_exit
      _
    %522 = vsyncpa [#allocation3], 1
    %s523 = scalar_lea.sflag [#allocation3], 1
    %524 = vsyncpa %s523, 1

</llo_original>
